<compile_context>
chip_gen: v6e
topology: v6e:2x2x1
jax: 0.10.0
libtpu: 0.0.40
codegen_flags: <defaults>
</compile_context>

<pallas_src>
import functools

import jax
import jax.numpy as jnp
from jax import lax
from jax.experimental import pallas as pl
from jax.experimental.pallas import tpu as pltpu

EPS = 1e-12

# Path-selection thresholds (static, trace-time).
_DIRECT_PATH_MAX_ELEMS = 32 * 1024   # use VPU broadcast-diff when BN*BN*D <= this
_GRIDLESS_MAX_ROWS = 512             # B==1 and N above this -> tiled grid path
_TILE = 256                          # row/col tile of the tiled path (MXU-sized)


# --------------------------------------------------------------------------
# Fused gridless kernel: whole problem in one VMEM tile.
# --------------------------------------------------------------------------
def _entropy_reg_fused_kernel(x_ref, loss_ref, *, B, N, eps, reduce_mean, use_mxu):
    """x_ref: VMEM (B*N, D).  loss_ref: SMEM (1,) f32 or VMEM (1, B) f32."""
    BN, D = x_ref.shape
    x_in = x_ref[...]
    xf = x_in.astype(jnp.float32)

    if use_mxu:
        # Mean-centering is distance-invariant and tames Gram cancellation.
        xf = xf - jnp.mean(xf, axis=0, keepdims=True)
        x_mm = xf.astype(x_in.dtype)          # bf16 stays bf16 into the MXU
        g = lax.dot_general(x_mm, x_mm, (((1,), (1,)), ((), ())),
                            preferred_element_type=jnp.float32)       # (BN, BN)
        xsq = xf * xf
        sq_col = jnp.sum(xsq, axis=1, keepdims=True)                  # (BN, 1)
        # Row-vector of squared norms via a 1xD matmul (avoids a transpose).
        sq_row = lax.dot_general(jnp.ones((1, D), jnp.float32), xsq,
                                 (((1,), (1,)), ((), ())),
                                 preferred_element_type=jnp.float32)  # (1, BN)
        d2 = sq_col + sq_row - 2.0 * g
    else:
        # Tiny regime: direct broadcast-difference on the VPU (exact, no MXU).
        diff = xf[:, None, :] - xf[None, :, :]                        # (BN, BN, D)
        d2 = jnp.sum(diff * diff, axis=-1)                            # (BN, BN)

    # Mask the diagonal (and cross-batch pairs) so they never win the row-min.
    ri = lax.broadcasted_iota(jnp.int32, (BN, BN), 0)
    ci = lax.broadcasted_iota(jnp.int32, (BN, BN), 1)
    invalid = ri == ci
    if B > 1:
        br = jnp.floor(ri.astype(jnp.float32) / float(N))
        bc = jnp.floor(ci.astype(jnp.float32) / float(N))
        invalid = invalid | (br != bc)
    d2 = jnp.where(invalid, jnp.inf, jnp.maximum(d2, 0.0))

    dmin2 = jnp.min(d2, axis=1, keepdims=True)        # (BN, 1) nearest-other d^2
    neg_log = -jnp.log(jnp.sqrt(dmin2) + eps)         # sqrt/log only on the minima

    if reduce_mean:
        # Fused batch mean (2-D case is B == 1) -> single SMEM scalar.
        loss_ref[0] = jnp.sum(neg_log) * (1.0 / B)
    else:
        # Per-batch sums, emitted lane-dense as (1, B).
        r2 = lax.broadcasted_iota(jnp.int32, (BN, B), 0)
        c2 = lax.broadcasted_iota(jnp.int32, (BN, B), 1)
        onehot = (r2 >= c2 * N) & (r2 < (c2 + 1) * N)
        loss_ref[...] = jnp.sum(jnp.where(onehot, neg_log, jnp.float32(0.0)),
                                axis=0, keepdims=True)                # (1, B)


# --------------------------------------------------------------------------
# Tiled grid kernel for the large 2-D (training-source table) case.
# Running element-wise min per row tile across column tiles.
# --------------------------------------------------------------------------
def _entropy_reg_tiled_kernel(x_rows_ref, x_cols_ref, out_ref, minacc_ref, *,
                              n_valid, eps, tile):
    i = pl.program_id(0)
    j = pl.program_id(1)

    @pl.when(j == 0)
    def _():
        minacc_ref[...] = jnp.full(minacc_ref.shape, jnp.inf, dtype=jnp.float32)

    xr = x_rows_ref[...]                                  # (tile, D)
    xc = x_cols_ref[...]                                  # (tile, D)
    D = xr.shape[1]

    g = lax.dot_general(xr, xc, (((1,), (1,)), ((), ())),
                        preferred_element_type=jnp.float32)            # (tile, tile)
    xrf = xr.astype(jnp.float32)
    xcf = xc.astype(jnp.float32)
    sq_r = jnp.sum(xrf * xrf, axis=1, keepdims=True)                   # (tile, 1)
    sq_c = lax.dot_general(jnp.ones((1, D), jnp.float32), xcf * xcf,
                           (((1,), (1,)), ((), ())),
                           preferred_element_type=jnp.float32)         # (1, tile)
    d2 = sq_r + sq_c - 2.0 * g

    row_g = i * tile + lax.broadcasted_iota(jnp.int32, (tile, tile), 0)
    col_g = j * tile + lax.broadcasted_iota(jnp.int32, (tile, tile), 1)
    invalid = (row_g == col_g) | (col_g >= n_valid)       # diag + column padding
    d2 = jnp.where(invalid, jnp.inf, jnp.maximum(d2, 0.0))

    minacc_ref[...] = jnp.minimum(minacc_ref[...],
                                  jnp.min(d2, axis=1, keepdims=True))

    @pl.when(j == pl.num_programs(1) - 1)
    def _():
        dmin2 = minacc_ref[...]
        contrib = -jnp.log(jnp.sqrt(dmin2) + eps)                      # (tile, 1)
        rows = i * tile + lax.broadcasted_iota(jnp.int32, (tile, 1), 0)
        out_ref[...] = jnp.where(rows < n_valid, contrib, jnp.float32(0.0))


def _tiled_loss_2d(x2d, n, eps, tile=_TILE):
    """Scalar loss for a (n, D) table too large for the gridless kernel."""
    D = x2d.shape[1]
    xc = x2d - jnp.mean(x2d, axis=0, keepdims=True)       # distance-invariant
    npad = ((n + tile - 1) // tile) * tile
    if npad != n:
        xc = jnp.pad(xc, ((0, npad - n), (0, 0)))
    grid = (npad // tile, npad // tile)
    kern = functools.partial(_entropy_reg_tiled_kernel,
                             n_valid=n, eps=float(eps), tile=tile)
    per_row = pl.pallas_call(
        kern,
        out_shape=jax.ShapeDtypeStruct((npad, 1), jnp.float32),
        grid_spec=pltpu.PrefetchScalarGridSpec(
            num_scalar_prefetch=0,
            grid=grid,
            in_specs=[pl.BlockSpec((tile, D), lambda i, j: (i, 0)),
                      pl.BlockSpec((tile, D), lambda i, j: (j, 0))],
            out_specs=pl.BlockSpec((tile, 1), lambda i, j: (i, 0)),
            scratch_shapes=[pltpu.VMEM((tile, 1), jnp.float32)]),
        compiler_params=pltpu.CompilerParams(
            dimension_semantics=("parallel", "arbitrary")),
    )(xc, xc)
    return jnp.sum(per_row)                               # padded rows contribute 0


# --------------------------------------------------------------------------
# Public wrapper matching EntropyRegularizationLoss.forward semantics.
# --------------------------------------------------------------------------
def entropy_regularization_loss(speaker_embedding, batch_mean=True, eps=EPS):
    """Args:
      speaker_embedding: (B, N, D) or (n_training_sources, D) float array.
      batch_mean: only used for the 3-D case, averages the per-batch losses.
    Returns:
      scalar (2-D input, or 3-D with batch_mean=True), else a (B,) vector.
    """
    x = jnp.asarray(speaker_embedding)
    if x.dtype not in (jnp.float32, jnp.bfloat16):
        x = x.astype(jnp.float32)

    is_2d = x.ndim == 2
    if is_2d:
        x = x[None]                     # (1, N, D); identical math to the 3-D case
    elif x.ndim != 3:
        raise ValueError('Invalid dimension.')

    B, N, D = x.shape
    reduce_mean = is_2d or batch_mean

    if N == 1:
        # Reference: distance matrix is [[0]] -> loss = -log(eps) per batch.
        val = -jnp.log(jnp.asarray(0.0, jnp.float32) + jnp.float32(eps))
        if reduce_mean:
            return val
        return jnp.full((B,), val, jnp.float32)

    BN = B * N
    x2d = x.reshape(BN, D)              # free reshape in XLA (contiguous)

    # Large 2-D training-source table -> tiled grid path (running-min accum).
    if B == 1 and N > _GRIDLESS_MAX_ROWS:
        loss = _tiled_loss_2d(x2d, n=N, eps=eps)
        if reduce_mean:
            return loss
        return loss.reshape(1)

    use_mxu = (BN * BN * D) > _DIRECT_PATH_MAX_ELEMS
    kern = functools.partial(_entropy_reg_fused_kernel, B=B, N=N, eps=float(eps),
                             reduce_mean=reduce_mean, use_mxu=use_mxu)

    # Keep headroom if a large problem still takes the gridless path.
    cparams = None
    est_bytes = 3 * BN * BN * 4 + 2 * BN * D * 4
    if est_bytes > 12 * 1024 * 1024:
        cparams = pltpu.CompilerParams(
            vmem_limit_bytes=min(est_bytes + (8 << 20), 128 << 20))

    if reduce_mean:
        out = pl.pallas_call(
            kern,
            out_shape=jax.ShapeDtypeStruct((1,), jnp.float32),
            in_specs=[pl.BlockSpec(memory_space=pltpu.MemorySpace.VMEM)],
            out_specs=pl.BlockSpec(memory_space=pltpu.MemorySpace.SMEM),
            compiler_params=cparams,
        )(x2d)
        return out[0]                   # scalar (2-D case or batch mean)

    out = pl.pallas_call(
        kern,
        out_shape=jax.ShapeDtypeStruct((1, B), jnp.float32),
        in_specs=[pl.BlockSpec(memory_space=pltpu.MemorySpace.VMEM)],
        out_specs=pl.BlockSpec(memory_space=pltpu.MemorySpace.VMEM),
        compiler_params=cparams,
    )(x2d)
    return out[0]                       # (B,) per-batch losses (lane-dense output)


# --------------------------------------------------------------------------
# Pure-JAX reference mirroring the PyTorch code, for sanity checks.
# --------------------------------------------------------------------------
def _reference(x, batch_mean=True, eps=EPS):
    x = jnp.asarray(x, jnp.float32)
    if x.ndim == 2:
        dist = jnp.linalg.norm(x[:, None, :] - x[None, :, :], axis=2)
        dist = 2 * jnp.max(dist) * jnp.eye(x.shape[0]) + dist
        dist = jnp.min(dist, axis=1)
        return -jnp.sum(jnp.log(dist + eps))
    dist = jnp.linalg.norm(x[:, :, None, :] - x[:, None, :, :], axis=3)
    dist = 2 * jnp.max(dist) * jnp.eye(x.shape[1])[None] + dist
    dist = jnp.min(dist, axis=2)
    loss = -jnp.sum(jnp.log(dist + eps), axis=1)
    return jnp.mean(loss) if batch_mean else loss


if __name__ == "__main__":
    key = jax.random.PRNGKey(0)
    k3, k2, km, kl = jax.random.split(key, 4)

    # Tiny 3-D case (direct VPU path, fused batch mean in SMEM scalar).
    emb3 = jax.random.normal(k3, (2, 4, 32), dtype=jnp.float32)
    loss3 = entropy_regularization_loss(emb3, batch_mean=True)
    jax.block_until_ready(loss3)
    ref3 = _reference(emb3, batch_mean=True)
    assert jnp.allclose(loss3, ref3, rtol=1e-4, atol=1e-4), (loss3, ref3)

    # Tiny 3-D case without batch mean (lane-dense (1, B) output).
    loss3v = entropy_regularization_loss(emb3, batch_mean=False)
    jax.block_until_ready(loss3v)
    ref3v = _reference(emb3, batch_mean=False)
    assert loss3v.shape == (2,)
    assert jnp.allclose(loss3v, ref3v, rtol=1e-4, atol=1e-4), (loss3v, ref3v)

    # Tiny 2-D case: (n_training_sources=6, latent_dim=32) -> scalar.
    emb2 = jax.random.normal(k2, (6, 32), dtype=jnp.float32)
    loss2 = entropy_regularization_loss(emb2)
    jax.block_until_ready(loss2)
    ref2 = _reference(emb2)
    assert jnp.allclose(loss2, ref2, rtol=1e-4, atol=1e-4), (loss2, ref2)

    # Medium 3-D case: flattened single-MXU Gram path + cross-batch masking.
    embm = jax.random.normal(km, (3, 24, 64), dtype=jnp.float32)
    lossm = entropy_regularization_loss(embm, batch_mean=False)
    jax.block_until_ready(lossm)
    refm = _reference(embm, batch_mean=False)
    assert jnp.allclose(lossm, refm, rtol=1e-4, atol=1e-3), (lossm, refm)
    lossm_mean = entropy_regularization_loss(embm, batch_mean=True)
    jax.block_until_ready(lossm_mean)
    refm_mean = _reference(embm, batch_mean=True)
    assert jnp.allclose(lossm_mean, refm_mean, rtol=1e-4, atol=1e-3), (lossm_mean, refm_mean)

    # Large 2-D case: tiled grid path with running-min accumulator (N padded to 768).
    embl = jax.random.normal(kl, (600, 64), dtype=jnp.float32)
    lossl = entropy_regularization_loss(embl)
    jax.block_until_ready(lossl)
    refl = _reference(embl)
    assert jnp.allclose(lossl, refl, rtol=1e-4, atol=1e-3), (lossl, refl)

    print("KERNEL_OK")
</pallas_src>

<mosaic_0001>
module attributes {stable_mosaic.version = 11 : i64} {
  func.func @_entropy_reg_fused_kernel(%arg0: memref<8x32xf32, #tpu.memory_space<vmem>>, %arg1: memref<1xf32, #tpu.memory_space<smem>>) attributes {dimension_semantics = [], scalar_prefetch = 0 : i64, scratch_operands = 0 : i64, tpu.core_type = #tpu.core_type<tc>} {
    %c0 = arith.constant 0 : index
    %c0_0 = arith.constant 0 : index
    %0 = vector.load %arg0[%c0, %c0_0] : memref<8x32xf32, #tpu.memory_space<vmem>>, vector<8x32xf32>
    %1 = vector.shape_cast %0 : vector<8x32xf32> to vector<8x1x32xf32>
    %2 = vector.shape_cast %0 : vector<8x32xf32> to vector<1x8x32xf32>
    %3 = vector.broadcast %1 : vector<8x1x32xf32> to vector<8x8x32xf32>
    %4 = vector.broadcast %2 : vector<1x8x32xf32> to vector<8x8x32xf32>
    %5 = arith.subf %3, %4 : vector<8x8x32xf32>
    %6 = arith.mulf %5, %5 : vector<8x8x32xf32>
    %cst = arith.constant dense<0.000000e+00> : vector<8x8xf32>
    %7 = vector.multi_reduction <add>, %6, %cst [2] : vector<8x8x32xf32> to vector<8x8xf32>
    %8 = tpu.iota {dimensions = array<i32: 0>} : vector<8x8xi32>
    %9 = tpu.iota {dimensions = array<i32: 1>} : vector<8x8xi32>
    %10 = arith.cmpi eq, %8, %9 : vector<8x8xi32>
    %11 = arith.sitofp %8 : vector<8x8xi32> to vector<8x8xf32>
    %cst_1 = arith.constant 4.000000e+00 : f32
    %12 = vector.broadcast %cst_1 : f32 to vector<8x8xf32>
    %13 = arith.divf %11, %12 : vector<8x8xf32>
    %14 = math.floor %13 : vector<8x8xf32>
    %15 = arith.sitofp %9 : vector<8x8xi32> to vector<8x8xf32>
    %cst_2 = arith.constant 4.000000e+00 : f32
    %16 = vector.broadcast %cst_2 : f32 to vector<8x8xf32>
    %17 = arith.divf %15, %16 : vector<8x8xf32>
    %18 = math.floor %17 : vector<8x8xf32>
    %19 = arith.cmpf one, %14, %18 : vector<8x8xf32>
    %20 = arith.ori %10, %19 : vector<8x8xi1>
    %cst_3 = arith.constant 0.000000e+00 : f32
    %21 = vector.broadcast %cst_3 : f32 to vector<8x8xf32>
    %22 = arith.maximumf %7, %21 : vector<8x8xf32>
    %cst_4 = arith.constant 0x7F800000 : f32
    %23 = vector.broadcast %cst_4 : f32 to vector<8x8xf32>
    %24 = arith.select %20, %23, %22 : vector<8x8xi1>, vector<8x8xf32>
    %cst_5 = arith.constant dense<0x7F800000> : vector<8xf32>
    %25 = vector.multi_reduction <minimumf>, %24, %cst_5 [1] : vector<8x8xf32> to vector<8xf32>
    %26 = vector.shape_cast %25 : vector<8xf32> to vector<8x1xf32>
    %27 = math.sqrt %26 : vector<8x1xf32>
    %cst_6 = arith.constant 9.99999996E-13 : f32
    %28 = vector.broadcast %cst_6 : f32 to vector<8x1xf32>
    %29 = arith.addf %27, %28 : vector<8x1xf32>
    %30 = math.log %29 : vector<8x1xf32>
    %cst_7 = arith.constant 0.000000e+00 : f32
    %31 = vector.broadcast %cst_7 : f32 to vector<8x1xf32>
    %32 = arith.subf %31, %30 : vector<8x1xf32>
    %33 = vector.shape_cast %32 : vector<8x1xf32> to vector<1x8x1xf32>
    %cst_8 = arith.constant dense<0.000000e+00> : vector<1xf32>
    %34 = vector.multi_reduction <add>, %33, %cst_8 [1, 2] : vector<1x8x1xf32> to vector<1xf32>
    %35 = vector.shape_cast %34 : vector<1xf32> to vector<1x1x1xf32>
    %36 = vector.extract %35[0, 0, 0] : f32 from vector<1x1x1xf32>
    %cst_9 = arith.constant 5.000000e-01 : f32
    %37 = arith.mulf %36, %cst_9 : f32
    %c0_10 = arith.constant 0 : index
    %38 = memref.load %arg1[%c0_10] : memref<1xf32, #tpu.memory_space<smem>>
    memref.store %37, %arg1[%c0_10] : memref<1xf32, #tpu.memory_space<smem>>
    return
  }
}

</mosaic_0001>

<llo_original>
// kernel: tpu_custom_call.1
$region0: #{tpu_custom_call.1}
  #allocation0 [shape = 'u32[]', space=smem, size = 0x4, offset = 0x4, fixed_abs, tag = 'smem constant byte address 0x4 - core index']
  #allocation1 [shape = 'u32[144,128]{1,0:T(1,128)}', space=vmem, size = 0x12000, scoped, tag = 'internal scratch']
  %s0 = inlined_call_operand.hbm [shape: f32[8,32], index: 0, kind: input, shape index: {}]
  %s1 = inlined_call_operand.hbm [shape: f32[1], index: 1, kind: output, shape index: {}]
  %s2 = sld [smem:[#allocation0]]
  $region18: #{tpu_custom_call.1} parent=0
    _
  %s4 = ssub.s32 1, %s2
  %s5 = scalar_select 0, %s4, %s2
  $region1: #{tpu_custom_call.1} parent=0
    #allocation2 [shape = 'u8[4096]{0}', space=vmem, size = 0x1000, scoped, tag = 'input window, operand 0, single buffered']
    #allocation3 [shape = 's32[1]{0}', space=sflag, size = 0x4, scoped, tag = 'scoped memory for tpu_custom_call.1']
    #allocation4 [shape = 's32[1]{0}', space=sflag, size = 0x4, scoped, tag = 'scoped memory for tpu_custom_call.1']
    #allocation5 [shape = 'u8[512]{0}', space=smem, size = 0x200, scoped, tag = 'output window, operand 0, single buffered']
    %6 = vsyncpa [#allocation3], 0
    %7 = vsyncpa [#allocation4], 0
    // Predicated region
    $region2: #{tpu_custom_call.1} parent=1 // pred_check
      _
    $region3: #{tpu_custom_call.1} parent=1 // pred_check_branch
      %9 = sbr.rel (0) target = $region5
    $region4: #{tpu_custom_call.1} parent=1 // pred_region
      %s11 = ssub.s32 128, 128
      %12 = vsyncadd [#allocation3], %s11
      %s14 = sshll.u32 [#allocation2], 4
      %s15 = int_to_ptr.vmem [resolvable:$true] %s14
      %17 = dma.hbm_to_vmem [thread:$0]  %s0, 128, %s15, [#allocation3]
    $region5: #{tpu_custom_call.1} parent=1 // pred_fallthru
      _
    // Predicated region
    $region6: #{tpu_custom_call.1} parent=1 // pred_check
      _
    $region7: #{tpu_custom_call.1} parent=1 // pred_check_branch
      %19 = sbr.rel (0) target = $region9
    $region8: #{tpu_custom_call.1} parent=1 // pred_region
      %20 = dma.done [#allocation3], 128
    $region9: #{tpu_custom_call.1} parent=1 // pred_fallthru
      _
    %v21 = vld [vmem:[#allocation2] sm:$0xff]
    %v23 = vcombine.high %v21, %v21
    %v25 = vunpack.c.l.s4 1966171168
    %v26 = vunpack.c.0.s8 %v25
    %v27 = vlaneseq
    %v28 = vshrl.u32 %v27, 7
    %v29 = vsub.s32 %v26, %v28
    %v30 = vrot.slane %v21, %v29
    %v32 = vunpack.c.l.s4 1966171168
    %v33 = vunpack.c.0.s8 %v32
    %v34 = vlaneseq
    %v35 = vshrl.u32 %v34, 7
    %v36 = vsub.s32 %v33, %v35
    %v37 = vrot.slane %v23, %v36
    %v38 = vcombine.high %v30, %v30
    %v39 = vcombine.high %v37, %v37
    %v41 = vunpack.c.l.s4 1966171168
    %v42 = vunpack.c.0.s8 %v41
    %v43 = vlaneseq
    %v44 = vshrl.u32 %v43, 7
    %v45 = vsub.s32 %v42, %v44
    %v46 = vrot.slane %v30, %v45
    %v48 = vunpack.c.l.s4 1966171168
    %v49 = vunpack.c.0.s8 %v48
    %v50 = vlaneseq
    %v51 = vshrl.u32 %v50, 7
    %v52 = vsub.s32 %v49, %v51
    %v53 = vrot.slane %v37, %v52
    %v55 = vunpack.c.l.s4 1966171168
    %v56 = vunpack.c.0.s8 %v55
    %v57 = vlaneseq
    %v58 = vshrl.u32 %v57, 7
    %v59 = vsub.s32 %v56, %v58
    %v60 = vrot.slane %v38, %v59
    %v62 = vunpack.c.l.s4 1966171168
    %v63 = vunpack.c.0.s8 %v62
    %v64 = vlaneseq
    %v65 = vshrl.u32 %v64, 7
    %v66 = vsub.s32 %v63, %v65
    %v67 = vrot.slane %v39, %v66
    %v68 = vcombine.high %v46, %v46
    %v69 = vcombine.high %v53, %v53
    %v70 = vcombine.high %v60, %v60
    %v71 = vcombine.high %v67, %v67
    %v72 = vlaneseq
    %v73 = vshrl.u32 %v72, 7
    %v74 = vsub.s32 0, %v73
    %v75 = vrot.slane %v46, %v74
    %v76 = vlaneseq
    %v77 = vshrl.u32 %v76, 7
    %v78 = vsub.s32 0, %v77
    %v79 = vrot.slane %v60, %v78
    %v80 = vlaneseq
    %v81 = vshrl.u32 %v80, 7
    %v82 = vsub.s32 0, %v81
    %v83 = vrot.slane %v68, %v82
    %v84 = vlaneseq
    %v85 = vshrl.u32 %v84, 7
    %v86 = vsub.s32 0, %v85
    %v87 = vrot.slane %v70, %v86
    %v88 = vlaneseq
    %v89 = vshrl.u32 %v88, 7
    %v90 = vsub.s32 0, %v89
    %v91 = vrot.slane %v53, %v90
    %v92 = vlaneseq
    %v93 = vshrl.u32 %v92, 7
    %v94 = vsub.s32 0, %v93
    %v95 = vrot.slane %v67, %v94
    %v96 = vlaneseq
    %v97 = vshrl.u32 %v96, 7
    %v98 = vsub.s32 0, %v97
    %v99 = vrot.slane %v69, %v98
    %v100 = vlaneseq
    %v101 = vshrl.u32 %v100, 7
    %v102 = vsub.s32 0, %v101
    %v103 = vrot.slane %v71, %v102
    %v112 = vsub.f32 %v75, %v21
    %v113 = vsub.f32 %v79, %v21
    %v114 = vsub.f32 %v83, %v21
    %v115 = vsub.f32 %v87, %v21
    %v116 = vsub.f32 %v91, %v21
    %v117 = vsub.f32 %v95, %v21
    %v118 = vsub.f32 %v99, %v21
    %v119 = vsub.f32 %v103, %v21
    %v120 = vmul.f32 %v112, %v112
    %v121 = vmul.f32 %v113, %v113
    %v122 = vmul.f32 %v114, %v114
    %v123 = vmul.f32 %v115, %v115
    %v124 = vmul.f32 %v116, %v116
    %v125 = vmul.f32 %v117, %v117
    %v126 = vmul.f32 %v118, %v118
    %v127 = vmul.f32 %v119, %v119
    %vm128 = vcmask 261120
    %v129 = vsel %vm128, %v120, 0.0
    %130 = vadd.xlane.f32.xlu0 %v129
    %v131 = vpop.xlane.xlu0 %130
    %v132 = vsel %vm128, %v121, 0.0
    %133 = vadd.xlane.f32.xlu0 %v132
    %v134 = vpop.xlane.xlu0 %133
    %v135 = vsel %vm128, %v122, 0.0
    %136 = vadd.xlane.f32.xlu0 %v135
    %v137 = vpop.xlane.xlu0 %136
    %v138 = vsel %vm128, %v123, 0.0
    %139 = vadd.xlane.f32.xlu0 %v138
    %v140 = vpop.xlane.xlu0 %139
    %v141 = vsel %vm128, %v124, 0.0
    %142 = vadd.xlane.f32.xlu0 %v141
    %v143 = vpop.xlane.xlu0 %142
    %v144 = vsel %vm128, %v125, 0.0
    %145 = vadd.xlane.f32.xlu0 %v144
    %v146 = vpop.xlane.xlu0 %145
    %v147 = vsel %vm128, %v126, 0.0
    %148 = vadd.xlane.f32.xlu0 %v147
    %v149 = vpop.xlane.xlu0 %148
    %v150 = vsel %vm128, %v127, 0.0
    %151 = vadd.xlane.f32.xlu0 %v150
    %v152 = vpop.xlane.xlu0 %151
    %v153 = vlaneseq
    %v154 = vshrl.u32 %v153, 7
    %v155 = vlaneseq
    %v156 = vand.u32 %v155, 127
    %vm157 = vcmp.eq.s32.totalorder %v154, %v156
    %v158 = vcvt.s32.f32 %v154
    %v159 = vrcp.pop 4.0
    %v160 = vmul.f32 %v158, %v159
    %v161 = vfloor.f32 %v160
    %v162 = vcvt.s32.f32 %v156
    %v163 = vmul.f32 %v162, %v159
    %v164 = vfloor.f32 %v163
    %vm165 = vcmp.ne.f32.partialorder %v161, %v164
    %vm166 = vmor %vm157, %vm165
    %v167 = vmax.f32 %v131, 0.0
    %v168 = vmax.f32 %v134, 0.0
    %v169 = vmax.f32 %v137, 0.0
    %v170 = vmax.f32 %v140, 0.0
    %v171 = vmax.f32 %v143, 0.0
    %v172 = vmax.f32 %v146, 0.0
    %v173 = vmax.f32 %v149, 0.0
    %v174 = vmax.f32 %v152, 0.0
    %v183 = vlaneseq
    %v184 = vshrl.u32 %v183, 7
    %v185 = vsub.s32 %v156, %v184
    %v186 = vrot.slane %v167, %v185
    %v187 = vlaneseq
    %v188 = vshrl.u32 %v187, 7
    %v189 = vsub.s32 %v156, %v188
    %v190 = vrot.slane %v168, %v189
    %v191 = vlaneseq
    %v192 = vshrl.u32 %v191, 7
    %v193 = vsub.s32 %v156, %v192
    %v194 = vrot.slane %v169, %v193
    %v195 = vlaneseq
    %v196 = vshrl.u32 %v195, 7
    %v197 = vsub.s32 %v156, %v196
    %v198 = vrot.slane %v170, %v197
    %v199 = vlaneseq
    %v200 = vshrl.u32 %v199, 7
    %v201 = vsub.s32 %v156, %v200
    %v202 = vrot.slane %v171, %v201
    %v203 = vlaneseq
    %v204 = vshrl.u32 %v203, 7
    %v205 = vsub.s32 %v156, %v204
    %v206 = vrot.slane %v172, %v205
    %v207 = vlaneseq
    %v208 = vshrl.u32 %v207, 7
    %v209 = vsub.s32 %v156, %v208
    %v210 = vrot.slane %v173, %v209
    %v211 = vlaneseq
    %v212 = vshrl.u32 %v211, 7
    %v213 = vsub.s32 %v156, %v212
    %v214 = vrot.slane %v174, %v213
    %vm215 = vcmask 1041409
    %v216 = vsel %vm215, %v190, %v186
    %vm217 = vcmask 1042434
    %v218 = vsel %vm217, %v194, %v216
    %vm219 = vcmask 1043459
    %v220 = vsel %vm219, %v198, %v218
    %vm221 = vcmask 1044484
    %v222 = vsel %vm221, %v202, %v220
    %vm223 = vcmask 1045509
    %v224 = vsel %vm223, %v206, %v222
    %vm225 = vcmask 1046534
    %v226 = vsel %vm225, %v210, %v224
    %vm227 = vcmask 1047559
    %v228 = vsel %vm227, %v214, %v226
    %v230 = vsel %vm166, inf, %v228
    %vm231 = vcmask 64512
    %v232 = vsel %vm231, %v230, inf
    %233 = vmin.xlane.f32.xlu0 %v232
    %v234 = vpop.xlane.xlu0 %233
    %v235 = vrsqrt.pop %v234
    %v236 = vmul.f32 %v234, %v235
    %vm237 = vcmp.eq.f32.partialorder %v234, inf
    %v238 = vsel %vm237, %v234, %v236
    %vm239 = vcmp.eq.f32.partialorder %v234, 0.0
    %v240 = vand.u32 %v234, 2147483648
    %v241 = vsel %vm239, %v240, %v238
    %v242 = vadd.f32 %v241, 1e-12
    %v243 = vlog2.pop %v242
    %v244 = vmul.f32 %v243, 0.6931472
    %v245 = vsub.f32 0.0, %v244
    %vm246 = vcmask 7168
    %v247 = vsel %vm246, %v245, 0.0
    %248 = vadd.xlane.f32.xlu0 %v247
    %v249 = vpop.xlane.xlu0 %248
    %v250 = vrot.slane %v249, 4
    %v251 = vadd.f32 %v249, %v250
    %v252 = vrot.slane %v251, 2
    %v253 = vadd.f32 %v251, %v252
    %v254 = vrot.slane %v253, 1
    %v255 = vadd.f32 %v253, %v254
    %s256 = vtos %v255
    %s257 = smul.f32 %s256, 0.5
    %s258 = scalar_lea.smem [#allocation5], 0
    %259 = sst [smem:[%s258]] %s257
    // Predicated region
    $region10: #{tpu_custom_call.1} parent=1 // pred_check
      _
    $region11: #{tpu_custom_call.1} parent=1 // pred_check_branch
      %261 = sbr.rel (0) target = $region13
    $region12: #{tpu_custom_call.1} parent=1 // pred_region
      %s263 = ssub.s32 16, 16
      %264 = vsyncadd [#allocation4], %s263
      %267 = dma.smem_to_hbm [#allocation5], 16, %s1, [#allocation4]
    $region13: #{tpu_custom_call.1} parent=1 // pred_fallthru
      _
    // Predicated region
    $region14: #{tpu_custom_call.1} parent=1 // pred_check
      _
    $region15: #{tpu_custom_call.1} parent=1 // pred_check_branch
      %269 = sbr.rel (0) target = $region17
    $region16: #{tpu_custom_call.1} parent=1 // pred_region
      %270 = dma.done [#allocation4], 16
    $region17: #{tpu_custom_call.1} parent=1 // pred_fallthru
      _
    %271 = sfence
    %272 = vsyncpa [#allocation3], 1
    %273 = vsyncpa [#allocation4], 1

</llo_original>
